<compile_context>
chip_gen: v5e
topology: v5e:2x2
jax: 0.10.0
libtpu: 0.0.40
codegen_flags: <defaults>
</compile_context>

<pallas_src>
import functools

import numpy as np

import jax
import jax.numpy as jnp
from jax.experimental import pallas as pl
from jax.experimental.pallas import tpu as pltpu


def _gelu_tanh(x):
    # tanh-approximate GELU: the tanh runs on the EUP (own bundle slot).
    c = 0.7978845608028654  # sqrt(2/pi)
    return 0.5 * x * (1.0 + jnp.tanh(c * (x + 0.044715 * (x * x * x))))


_ROLL_LIKE_NUMPY = None


def _roll_like_numpy():
    """Probe pltpu.roll's rotation direction once with a one-vreg kernel."""
    global _ROLL_LIKE_NUMPY
    if _ROLL_LIKE_NUMPY is None:
        def k(x_ref, o_ref):
            o_ref[...] = pltpu.roll(x_ref[...], 1, axis=0)

        x = jnp.tile(jnp.arange(8, dtype=jnp.float32)[:, None], (1, 128))
        out = pl.pallas_call(
            k, out_shape=jax.ShapeDtypeStruct((8, 128), jnp.float32))(x)
        # numpy convention: out[i] = x[i-1]  =>  out[0, 0] == 7
        _ROLL_LIKE_NUMPY = bool(jax.device_get(out)[0, 0] == 7.0)
    return _ROLL_LIKE_NUMPY


def _leff_kernel(x_ref, w1_ref, b1_ref, dww_ref, dwb_ref, w2_ref, b2_ref,
                 ml_ref, mr_ref, o_ref, slab_ref, *, W, SH, S,
                 shift_prev, shift_next):
    s = pl.program_id(1)
    SHW = SH * W
    Hp = w1_ref.shape[1]

    # ---------------- linear1 + GELU on the strip plus a 1-row halo ---------
    start = s * SHW
    if SHW % 128 == 0:
        start = pl.multiple_of(start, 128)
    elif SHW % 8 == 0:
        start = pl.multiple_of(start, 8)
    xs = x_ref[pl.ds(start, SHW + 2 * W), :]                     # bf16 tokens
    h = jnp.dot(xs, w1_ref[...], preferred_element_type=jnp.float32)
    h = _gelu_tanh(h + b1_ref[...])
    # single aligned full-slab store, bf16 scratch
    slab_ref[...] = h.astype(slab_ref.dtype)

    # zero only the border halo rows (image top / bottom), never the interior
    @pl.when(s == 0)
    def _():
        slab_ref[0:W, :] = jnp.zeros((W, Hp), slab_ref.dtype)

    @pl.when(s == S - 1)
    def _():
        slab_ref[(SH + 1) * W:(SH + 2) * W, :] = jnp.zeros((W, Hp),
                                                           slab_ref.dtype)

    # ---------------- depthwise 3x3 conv: 3 aligned slab loads + rolls ------
    k = dww_ref[...]                                             # (9, Hp) f32
    t0 = slab_ref[0:SHW, :].astype(jnp.float32)                  # rows r + 0
    t1 = slab_ref[W:W + SHW, :].astype(jnp.float32)              # rows r + 1
    t2 = slab_ref[2 * W:2 * W + SHW, :].astype(jnp.float32)      # rows r + 2

    # centre-column taps (dx == 1)
    acc = t0 * k[1:2, :] + t1 * k[4:5, :] + t2 * k[7:8, :]
    # west-neighbour taps (dx == 0): value at column w-1 (XLU roll)
    accl = (pltpu.roll(t0, shift_prev, axis=0) * k[0:1, :] +
            pltpu.roll(t1, shift_prev, axis=0) * k[3:4, :] +
            pltpu.roll(t2, shift_prev, axis=0) * k[6:7, :])
    # east-neighbour taps (dx == 2): value at column w+1
    accr = (pltpu.roll(t0, shift_next, axis=0) * k[2:3, :] +
            pltpu.roll(t1, shift_next, axis=0) * k[5:6, :] +
            pltpu.roll(t2, shift_next, axis=0) * k[8:9, :])
    # image-edge column masks ((SHW, 1), broadcast along lanes)
    acc = acc + accl * ml_ref[...] + accr * mr_ref[...]

    y = _gelu_tanh(acc + dwb_ref[...])

    # ---------------- linear2 (bf16 MXU, f32 accumulation) ------------------
    out = jnp.dot(y.astype(jnp.bfloat16), w2_ref[...],
                  preferred_element_type=jnp.float32)
    out = out + b2_ref[...]
    o_ref[...] = out.astype(o_ref.dtype)


def _round_up(v, m):
    return ((v + m - 1) // m) * m


def _pick_strip_rows(H, W):
    for cand in (8, 16, 4, 2, 1):
        if H % cand == 0 and (cand * W) % 8 == 0:
            return cand
    return H            # single strip per image (block equals full dim)


def leff_forward(x, x_size, params):
    """Fused LeFF forward.  x: (B, L, C); x_size: (H, W) with H*W == L."""
    B, L, C = x.shape
    H, W = x_size
    assert H * W == L
    hidden = params["w1"].shape[1]
    out_f = params["w2"].shape[1]

    f32, bf16 = jnp.float32, jnp.bfloat16

    # lane-dense (multiple-of-128) channel dims; padding is zeros and the
    # extra output columns are sliced off below.
    Cp = _round_up(C, 128)
    Hp = _round_up(hidden, 128)
    Op = _round_up(out_f, 128)

    SH = _pick_strip_rows(H, W)          # image rows per grid step
    S = H // SH
    SHW = SH * W

    # ---- padded / bf16 parameters (wrapper-side layout plumbing) -----------
    w1p = jnp.zeros((Cp, Hp), bf16).at[:C, :hidden].set(params["w1"].astype(bf16))
    b1p = jnp.zeros((1, Hp), f32).at[:, :hidden].set(params["b1"].reshape(1, hidden))
    dwwp = jnp.zeros((9, Hp), f32).at[:, :hidden].set(params["dw_w"])
    dwbp = jnp.zeros((1, Hp), f32).at[:, :hidden].set(params["dw_b"].reshape(1, hidden))
    w2p = jnp.zeros((Hp, Op), bf16).at[:hidden, :out_f].set(params["w2"].astype(bf16))
    b2p = jnp.zeros((1, Op), f32).at[:, :out_f].set(params["b2"].reshape(1, out_f))

    # ---- x: channel-pad to Cp, add one zero image row above and below ------
    ximg = jnp.pad(x, ((0, 0), (0, 0), (0, Cp - C))).reshape(B, H, W, Cp)
    xpad = jnp.pad(ximg, ((0, 0), (1, 1), (0, 0), (0, 0)))
    xpad = xpad.reshape(B, (H + 2) * W, Cp).astype(bf16)

    # ---- image-edge column masks for the dx = -1 / +1 conv taps ------------
    col = np.arange(SHW) % W
    mask_l = jnp.asarray((col > 0).astype(np.float32).reshape(SHW, 1))
    mask_r = jnp.asarray((col < W - 1).astype(np.float32).reshape(SHW, 1))

    # pltpu.roll rotation direction (probed once); nonnegative shifts only.
    shift_prev = 1 if _roll_like_numpy() else SHW - 1   # out[i] = t[i-1]
    shift_next = SHW - shift_prev                       # out[i] = t[i+1]

    # ---- VMEM budget / scheduler hints --------------------------------------
    x_blk = (H + 2) * W * Cp * 2
    o_blk = SHW * Op * x.dtype.itemsize
    w_bytes = (Cp * Hp + Hp * Op) * 2 + (9 + 2) * Hp * 4 + Op * 4
    scratch_bytes = (SH + 2) * W * Hp * 2
    est = 2 * (x_blk + o_blk + w_bytes + 2 * SHW * 4) + scratch_bytes
    vmem_limit = int(min(64 * 2 ** 20, max(32 * 2 ** 20, 2 * est)))

    cost = pl.CostEstimate(
        flops=int(2 * B * L * (Cp * Hp + 9 * Hp + Hp * Op)),
        transcendentals=int(2 * B * L * Hp),
        bytes_accessed=int(B * x_blk + B * L * Op * x.dtype.itemsize + w_bytes))

    kernel = functools.partial(_leff_kernel, W=W, SH=SH, S=S,
                               shift_prev=shift_prev, shift_next=shift_next)

    out_padded = pl.pallas_call(
        kernel,
        out_shape=jax.ShapeDtypeStruct((B, L, Op), x.dtype),
        grid_spec=pltpu.PrefetchScalarGridSpec(
            num_scalar_prefetch=0,
            grid=(B, S),
            in_specs=[
                # padded x rows: one resident block per batch element
                pl.BlockSpec((None, (H + 2) * W, Cp), lambda b, s: (b, 0, 0)),
                pl.BlockSpec((Cp, Hp), lambda b, s: (0, 0)),     # w1
                pl.BlockSpec((1, Hp), lambda b, s: (0, 0)),      # b1
                pl.BlockSpec((9, Hp), lambda b, s: (0, 0)),      # dw weight
                pl.BlockSpec((1, Hp), lambda b, s: (0, 0)),      # dw bias
                pl.BlockSpec((Hp, Op), lambda b, s: (0, 0)),     # w2
                pl.BlockSpec((1, Op), lambda b, s: (0, 0)),      # b2
                pl.BlockSpec((SHW, 1), lambda b, s: (0, 0)),     # left-edge mask
                pl.BlockSpec((SHW, 1), lambda b, s: (0, 0)),     # right-edge mask
            ],
            out_specs=pl.BlockSpec((None, SHW, Op), lambda b, s: (b, s, 0)),
            scratch_shapes=[pltpu.VMEM(((SH + 2) * W, Hp), bf16)],
        ),
        compiler_params=pltpu.CompilerParams(
            dimension_semantics=("parallel", "parallel"),
            vmem_limit_bytes=vmem_limit),
        cost_estimate=cost,
    )(xpad, w1p, b1p, dwwp, dwbp, w2p, b2p, mask_l, mask_r)

    return out_padded[..., :out_f]


def leff_reference(x, x_size, params):
    """Pure-JAX reference mirroring the kernel's numerics
    (bf16 MXU inputs, f32 accumulation, bf16 intermediates, tanh GELU)."""
    B, L, C = x.shape
    H, W = x_size
    hidden = params["w1"].shape[1]
    f32, bf16 = jnp.float32, jnp.bfloat16

    h = jnp.dot(x.astype(bf16), params["w1"].astype(bf16),
                preferred_element_type=f32) + params["b1"]
    h = _gelu_tanh(h).astype(bf16).astype(f32)

    img = h.reshape(B, H, W, hidden)                    # NHWC
    dw = params["dw_w"].reshape(3, 3, 1, hidden)        # HWIO, depthwise
    y = jax.lax.conv_general_dilated(
        img, dw, window_strides=(1, 1), padding="SAME",
        dimension_numbers=("NHWC", "HWIO", "NHWC"),
        feature_group_count=hidden)
    y = _gelu_tanh(y + params["dw_b"].reshape(1, 1, 1, hidden)).astype(bf16)

    out = jnp.dot(y.reshape(B, L, hidden), params["w2"].astype(bf16),
                  preferred_element_type=f32) + params["b2"]
    return out.astype(x.dtype)


def make_params(key, in_features, hidden_features, out_features):
    ks = jax.random.split(key, 6)
    s1 = 1.0 / jnp.sqrt(in_features).astype(jnp.float32)
    s2 = 1.0 / jnp.sqrt(hidden_features).astype(jnp.float32)
    s3 = 1.0 / 3.0
    return {
        # linear1: in -> hidden   (stored as (in, hidden); x @ w1 + b1)
        "w1": jax.random.uniform(ks[0], (in_features, hidden_features),
                                 jnp.float32, -s1, s1),
        "b1": jax.random.uniform(ks[1], (1, hidden_features),
                                 jnp.float32, -s1, s1),
        # depthwise conv 3x3, groups=hidden: stored as (9, hidden) = (dy*3+dx, c)
        "dw_w": jax.random.uniform(ks[2], (9, hidden_features),
                                   jnp.float32, -s3, s3),
        "dw_b": jax.random.uniform(ks[3], (1, hidden_features),
                                   jnp.float32, -s3, s3),
        # linear2: hidden -> out
        "w2": jax.random.uniform(ks[4], (hidden_features, out_features),
                                 jnp.float32, -s2, s2),
        "b2": jax.random.uniform(ks[5], (1, out_features),
                                 jnp.float32, -s2, s2),
    }


if __name__ == "__main__":
    key = jax.random.PRNGKey(0)
    k_x, k_p = jax.random.split(key)

    B = 2
    H, W = 16, 16
    L = H * W
    in_features = 8
    hidden_features = 32
    out_features = in_features            # LeFF default: out = in

    x = jax.random.normal(k_x, (B, L, in_features), jnp.float32)
    params = make_params(k_p, in_features, hidden_features, out_features)

    out = leff_forward(x, (H, W), params)
    out = jax.block_until_ready(out)

    ref = leff_reference(x, (H, W), params)
    err = float(jnp.max(jnp.abs(out - ref)))
    assert out.shape == (B, L, out_features), out.shape
    assert err < 2e-3, f"max abs error vs reference: {err}"

    print("KERNEL_OK")
</pallas_src>

<mosaic_0001>
module attributes {stable_mosaic.version = 11 : i64} {
  func.func @k(%arg0: memref<8x128xf32, #tpu.memory_space<vmem>>, %arg1: memref<8x128xf32, #tpu.memory_space<vmem>>) attributes {dimension_semantics = [], scalar_prefetch = 0 : i64, scratch_operands = 0 : i64, tpu.core_type = #tpu.core_type<tc>} {
    %c0 = arith.constant 0 : index
    %c0_0 = arith.constant 0 : index
    %0 = vector.load %arg0[%c0, %c0_0] : memref<8x128xf32, #tpu.memory_space<vmem>>, vector<8x128xf32>
    %c1_i32 = arith.constant 1 : i32
    %1 = tpu.dynamic_rotate %0 by %c1_i32 dim 0 : vector<8x128xf32>, i32 -> vector<8x128xf32>
    %c0_1 = arith.constant 0 : index
    %c0_2 = arith.constant 0 : index
    %2 = vector.load %arg1[%c0_1, %c0_2] : memref<8x128xf32, #tpu.memory_space<vmem>>, vector<8x128xf32>
    tpu.vector_store %arg1[%c0_1, %c0_2], %1 {strides = array<i32>} : memref<8x128xf32, #tpu.memory_space<vmem>>, vector<8x128xf32>,
    return
  }
}

</mosaic_0001>

<llo_original>
// kernel: tpu_custom_call.1
$region0: #{tpu_custom_call.1}
  #allocation0 [shape = 'u32[]', space=smem, size = 0x4, offset = 0x4, fixed_abs, tag = 'smem constant byte address 0x4 - core index']
  #allocation1 [shape = 'u32[72,128]{1,0:T(1,128)}', space=vmem, size = 0x9000, scoped, tag = 'internal scratch']
  %s0 = inlined_call_operand.hbm [shape: f32[8,128], index: 0, kind: input, shape index: {}]
  %s1 = inlined_call_operand.hbm [shape: f32[8,128], index: 1, kind: output, shape index: {}]
  %s2 = sld [smem:[#allocation0]]
  $region18: #{tpu_custom_call.1} parent=0
    _
  %s4 = ssub.s32 1, %s2
  %s5 = scalar_select 0, %s4, %s2
  $region1: #{tpu_custom_call.1} parent=0
    #allocation2 [shape = 'u8[4096]{0}', space=vmem, size = 0x1000, scoped, tag = 'input window, operand 0, single buffered']
    #allocation3 [shape = 's32[1]{0}', space=sflag, size = 0x4, scoped, tag = 'scoped memory for tpu_custom_call.1']
    #allocation4 [shape = 's32[1]{0}', space=sflag, size = 0x4, scoped, tag = 'scoped memory for tpu_custom_call.1']
    #allocation5 [shape = 'u8[4096]{0}', space=vmem, size = 0x1000, scoped, tag = 'output window, operand 0, single buffered']
    %6 = vsyncpa [#allocation3], 0
    %7 = vsyncpa [#allocation4], 0
    // Predicated region
    $region2: #{tpu_custom_call.1} parent=1 // pred_check
      _
    $region3: #{tpu_custom_call.1} parent=1 // pred_check_branch
      %9 = sbr.rel (0) target = $region5
    $region4: #{tpu_custom_call.1} parent=1 // pred_region
      %11 = vsyncadd [#allocation3], 0
      %s13 = sshll.u32 %s0, 4
      %s14 = int_to_ptr.hbm [resolvable:$true] %s13
      %s15 = sshll.u32 [#allocation2], 4
      %s16 = int_to_ptr.vmem [resolvable:$true] %s15
      %18 = dma.hbm_to_vmem [thread:$0]  %s14, 128, %s16, [#allocation3]
    $region5: #{tpu_custom_call.1} parent=1 // pred_fallthru
      _
    // Predicated region
    $region6: #{tpu_custom_call.1} parent=1 // pred_check
      _
    $region7: #{tpu_custom_call.1} parent=1 // pred_check_branch
      %20 = sbr.rel (0) target = $region9
    $region8: #{tpu_custom_call.1} parent=1 // pred_region
      %22 = dma.done [#allocation3], 128
    $region9: #{tpu_custom_call.1} parent=1 // pred_fallthru
      _
    %v23 = vld [vmem:[#allocation2] sm:$0xff]
    %v24 = vrot.slane %v23, 7
    %25 = vst [vmem:[#allocation5] sm:$0xff] %v24
    // Predicated region
    $region10: #{tpu_custom_call.1} parent=1 // pred_check
      _
    $region11: #{tpu_custom_call.1} parent=1 // pred_check_branch
      %27 = sbr.rel (0) target = $region13
    $region12: #{tpu_custom_call.1} parent=1 // pred_region
      %29 = vsyncadd [#allocation4], 0
      %s31 = sshll.u32 [#allocation5], 4
      %s32 = int_to_ptr.vmem [resolvable:$true] %s31
      %s33 = sshll.u32 %s1, 4
      %s34 = int_to_ptr.hbm [resolvable:$true] %s33
      %36 = dma.vmem_to_hbm [thread:$0]  %s32, 128, %s34, [#allocation4]
    $region13: #{tpu_custom_call.1} parent=1 // pred_fallthru
      _
    // Predicated region
    $region14: #{tpu_custom_call.1} parent=1 // pred_check
      _
    $region15: #{tpu_custom_call.1} parent=1 // pred_check_branch
      %38 = sbr.rel (0) target = $region17
    $region16: #{tpu_custom_call.1} parent=1 // pred_region
      %40 = dma.done [#allocation4], 128
    $region17: #{tpu_custom_call.1} parent=1 // pred_fallthru
      _
    %41 = vsyncpa [#allocation3], 1
    %42 = vsyncpa [#allocation4], 1

</llo_original>
